<compile_context>
chip_gen: v7x
topology: tpu7x:2x2x1
jax: 0.10.0
libtpu: 0.0.40
codegen_flags: <defaults>
</compile_context>

<pallas_src>
from functools import partial
from typing import NamedTuple

import jax
import jax.numpy as jnp
from jax.experimental import pallas as pl
from jax.experimental.pallas import tpu as pltpu


# ---------------------------------------------------------------------------
# Host-side helpers / hardware probes
# ---------------------------------------------------------------------------
def _round_up(v, m):
    return (v + m - 1) // m * m


def _vmem_capacity_bytes():
    try:
        return int(pltpu.get_tpu_info().vmem_capacity_bytes)
    except Exception:
        return 64 << 20  # conservative fallback: assume v7x (64 MiB / TensorCore)


_SINGLE_BUF_OK = None


def _single_buffer_ok():
    """Probe once whether pipeline_mode=pl.Buffered(1) works for resident blocks."""
    global _SINGLE_BUF_OK
    if _SINGLE_BUF_OK is None:
        try:
            def k(x_ref, o_ref):
                o_ref[...] = x_ref[...] * 2.0

            f = pl.pallas_call(
                k,
                out_shape=jax.ShapeDtypeStruct((16, 128), jnp.float32),
                grid=(2,),
                in_specs=[pl.BlockSpec((8, 128), lambda i: (0, 0),
                                       pipeline_mode=pl.Buffered(1))],
                out_specs=pl.BlockSpec((8, 128), lambda i: (i, 0)),
            )
            jax.block_until_ready(f(jnp.ones((8, 128), jnp.float32)))
            _SINGLE_BUF_OK = True
        except Exception:
            _SINGLE_BUF_OK = False
    return _SINGLE_BUF_OK


def _resident_spec(shape, single_buf):
    """Constant-index_map block (same tile every grid step); single-buffered when supported."""
    idx = lambda *_: (0,) * len(shape)
    if single_buf:
        return pl.BlockSpec(shape, idx, pipeline_mode=pl.Buffered(1))
    return pl.BlockSpec(shape, idx)


# ---------------------------------------------------------------------------
# Plan (static, hashable) — generation-aware tiling / VMEM policy
# ---------------------------------------------------------------------------
class Plan(NamedTuple):
    n: int
    in_ch: int
    hid: int
    out_ch: int
    in_p: int
    cat: int
    cat_p: int
    n_pad: int
    tm: int
    nt: int
    fused: bool
    single_buf: bool
    vmem_limit: int


def _fused_footprint(n_pad, in_p, cat_p, hid, out):
    bf, f4 = 2, 4
    io = (n_pad * in_p * bf + n_pad * n_pad * bf + in_p * cat_p * bf
          + hid * out * bf + (cat_p + hid + out) * f4 + n_pad * out * f4)
    temps = n_pad * (cat_p + 2 * hid + 2 * out) * f4
    return 2 * io + temps


def _tiled_footprint(tm, n_pad, in_p, cat_p, hid, out, resident_bufs):
    """Per-pallas_call VMEM footprint; each call has its own scope -> take the MAX."""
    bf, f4 = 2, 4
    r = resident_bufs
    s1 = (r * (in_p * cat_p * bf + cat_p * f4)
          + 2 * (tm * in_p * bf + tm * hid * bf + tm * out * f4)
          + tm * cat_p * f4)
    s2 = (r * (n_pad * hid * bf + hid * out * bf + hid * f4)
          + 2 * (tm * n_pad * bf + tm * out * bf)
          + 2 * tm * hid * f4)
    s3 = (r * (n_pad * out * bf + out * f4)
          + 2 * (tm * n_pad * bf + 2 * tm * out * f4)
          + tm * out * f4)
    return max(s1, s2, s3)


def _choose_tile(n, in_p, cat_p, hid, out, budget, resident_bufs, prefer_even_nt):
    n16 = _round_up(n, 16)
    cands = []
    if n16 <= 256:
        cands.append(n16)                       # whole graph in one row tile
    cands += [t for t in (512, 384, 256, 128, 64, 32, 16)
              if t <= n16 and t not in cands]
    feasible = []
    for tm in cands:
        n_pad = _round_up(n, tm)
        if n_pad - n16 > max(63, n16 // 8):     # avoid excessive row padding
            continue
        if _tiled_footprint(tm, n_pad, in_p, cat_p, hid, out, resident_bufs) <= budget:
            feasible.append((tm, n_pad))
    if not feasible:
        return 16, _round_up(n, 16)
    if prefer_even_nt:                          # v7x: split grid evenly over 2 TCs
        for tm, n_pad in feasible:
            nt = n_pad // tm
            if nt == 1 or nt % 2 == 0:
                return tm, n_pad
    return feasible[0]


def make_plan(n, in_ch, hid, out_ch, *, row_tile=None, force_tiled=False):
    vmem_cap = _vmem_capacity_bytes()
    is_v7x = vmem_cap <= (64 << 20)
    # ~40 MiB tile budget on v7x, ~100 MiB on v5e/v6e.
    budget = (min(int(0.62 * vmem_cap), 40 << 20) if is_v7x
              else min(int(0.78 * vmem_cap), 100 << 20))
    cap = int(0.85 * vmem_cap)                  # hard cap for vmem_limit_bytes
    single_buf = _single_buffer_ok()
    r = 1 if single_buf else 2

    in_p = _round_up(in_ch, 128)
    cat = hid + out_ch                          # W1 | Wfc real concat (no zero columns between)
    cat_p = _round_up(cat, 128)
    n16 = _round_up(n, 16)

    fused_fp = _fused_footprint(n16, in_p, cat_p, hid, out_ch)
    if row_tile is None and not force_tiled and fused_fp <= budget:
        vmem_limit = int(min(max(fused_fp + (4 << 20), 16 << 20), cap))
        return Plan(n, in_ch, hid, out_ch, in_p, cat, cat_p, n16, n16, 1,
                    True, single_buf, vmem_limit)

    if row_tile is not None:
        tm = max(16, _round_up(int(row_tile), 16))
        n_pad = _round_up(max(n, tm), tm)
    else:
        tm, n_pad = _choose_tile(n, in_p, cat_p, hid, out_ch, budget, r,
                                 prefer_even_nt=is_v7x)
    nt = n_pad // tm
    fp = _tiled_footprint(tm, n_pad, in_p, cat_p, hid, out_ch, r)
    vmem_limit = int(min(max(fp + (4 << 20), 16 << 20), cap))
    return Plan(n, in_ch, hid, out_ch, in_p, cat, cat_p, n_pad, tm, nt,
                False, single_buf, vmem_limit)


# ---------------------------------------------------------------------------
# Graph preprocessing — hoisted out of the forward pass, cached per graph
# ---------------------------------------------------------------------------
@partial(jax.jit, static_argnames=("num_nodes", "n_pad"))
def prepare_graph(edge_index, *, num_nodes, n_pad):
    """A_hat = D^-1/2 (A + remaining self loops) D^-1/2, bf16, (n_pad, n_pad)."""
    src, dst = edge_index[0], edge_index[1]
    f32, bf16 = jnp.float32, jnp.bfloat16
    deg = jnp.zeros((n_pad,), f32).at[dst].add(jnp.ones(src.shape, f32))   # duplicates summed
    self_cnt = jnp.zeros((n_pad,), f32).at[dst].add(jnp.where(src == dst, 1.0, 0.0))
    valid = jnp.arange(n_pad) < num_nodes
    add_loop = valid & (self_cnt == 0.0)                                    # add_remaining_self_loops
    deg = deg + jnp.where(add_loop, 1.0, 0.0)
    dinv = jnp.where(deg > 0, jax.lax.rsqrt(deg), 0.0)
    # Adjacency scatter directly in bf16 (exact for edge multiplicities < 256);
    # the normalization below is element-wise and fuses, so no f32 NxN HBM slab.
    adj = jnp.zeros((n_pad, n_pad), bf16).at[dst, src].add(jnp.ones(src.shape, bf16))
    adj = adj.astype(f32) + jnp.diag(jnp.where(add_loop, 1.0, 0.0))
    return (dinv[:, None] * adj * dinv[None, :]).astype(bf16)


# ---------------------------------------------------------------------------
# Kernels
# ---------------------------------------------------------------------------
def _make_fused_kernel(hid, out):
    """Whole ResGAT block in one call (everything resident in VMEM)."""
    def kernel(x_ref, a_ref, wcat_ref, w2_ref, bcat_ref, b1_ref, b2_ref, o_ref):
        bf16 = jnp.bfloat16
        a = a_ref[...]
        xw = jnp.dot(x_ref[...], wcat_ref[...],
                     preferred_element_type=jnp.float32) + bcat_ref[...]
        t1 = xw[:, :hid]                       # graph-conv-1 features (bias added post-agg)
        res = xw[:, hid:hid + out]             # residual branch (bfc folded into bcat)
        h = jnp.maximum(jnp.dot(a, t1.astype(bf16),
                                preferred_element_type=jnp.float32) + b1_ref[...], 0.0)
        # TODO(synk): nn.Dropout(p=0.2) between the convs is eval-mode identity here.
        t2 = jnp.dot(h.astype(bf16), w2_ref[...], preferred_element_type=jnp.float32)
        y = jnp.dot(a, t2.astype(bf16), preferred_element_type=jnp.float32) + b2_ref[...]
        o_ref[...] = jnp.maximum(y + res, 0.0)
    return kernel


def _make_xform_kernel(hid, out):
    """Stage 1: one fused matmul x @ [W1|Wfc] -> t1, res."""
    def kernel(x_ref, wcat_ref, bcat_ref, t1_ref, res_ref):
        xw = jnp.dot(x_ref[...], wcat_ref[...],
                     preferred_element_type=jnp.float32) + bcat_ref[...]
        t1_ref[...] = xw[:, :hid].astype(t1_ref.dtype)
        res_ref[...] = xw[:, hid:hid + out]
    return kernel


def _agg1_kernel(a_ref, t1_ref, b1_ref, w2_ref, t2_ref):
    """Stage 2: t2 = relu(A_hat @ t1 + b1) @ W2."""
    s = jnp.dot(a_ref[...], t1_ref[...], preferred_element_type=jnp.float32)
    h = jnp.maximum(s + b1_ref[...], 0.0)
    # TODO(synk): nn.Dropout(p=0.2) between the convs is eval-mode identity here.
    t2_ref[...] = jnp.dot(h.astype(w2_ref.dtype), w2_ref[...],
                          preferred_element_type=jnp.float32).astype(t2_ref.dtype)


def _agg2_kernel(a_ref, t2_ref, b2_ref, res_ref, o_ref):
    """Stage 3: out = relu(A_hat @ t2 + b2 + res)."""
    s = jnp.dot(a_ref[...], t2_ref[...], preferred_element_type=jnp.float32)
    o_ref[...] = jnp.maximum(s + b2_ref[...] + res_ref[...], 0.0)


# ---------------------------------------------------------------------------
# Forward pass
# ---------------------------------------------------------------------------
@partial(jax.jit, static_argnames=("plan",))
def resgat_forward(x, a_hat, params, *, plan):
    p = plan
    bf16, f32 = jnp.bfloat16, jnp.float32

    # ---- pad / cast operands (MXU inputs bf16, bias / epilogue math f32) ----
    x_p = jnp.pad(x, ((0, p.n_pad - p.n), (0, p.in_p - p.in_ch))).astype(bf16)
    wcat = jnp.concatenate([params["w1"], params["wfc"]], axis=1)
    wcat = jnp.pad(wcat, ((0, p.in_p - p.in_ch), (0, p.cat_p - p.cat))).astype(bf16)
    bcat = jnp.concatenate([jnp.zeros((p.hid,), f32), params["bfc"].astype(f32)])
    bcat = jnp.pad(bcat, (0, p.cat_p - p.cat)).reshape(1, p.cat_p)
    w2 = params["w2"].astype(bf16)
    b1 = params["b1"].reshape(1, p.hid).astype(f32)
    b2 = params["b2"].reshape(1, p.out_ch).astype(f32)

    if p.fused:
        # Small-graph fast path: one pallas_call, everything resident in VMEM.
        ce = pl.CostEstimate(
            flops=2 * p.n_pad * (p.in_p * p.cat_p + p.n_pad * p.hid
                                 + p.hid * p.out_ch + p.n_pad * p.out_ch),
            transcendentals=0,
            bytes_accessed=(2 * p.n_pad * p.in_p + 2 * p.n_pad * p.n_pad
                            + 2 * p.in_p * p.cat_p + 2 * p.hid * p.out_ch
                            + 4 * p.n_pad * p.out_ch))
        out_pad = pl.pallas_call(
            _make_fused_kernel(p.hid, p.out_ch),
            out_shape=jax.ShapeDtypeStruct((p.n_pad, p.out_ch), f32),
            grid=(1,),
            in_specs=[pl.BlockSpec((p.n_pad, p.in_p), lambda i: (0, 0)),
                      pl.BlockSpec((p.n_pad, p.n_pad), lambda i: (0, 0)),
                      pl.BlockSpec((p.in_p, p.cat_p), lambda i: (0, 0)),
                      pl.BlockSpec((p.hid, p.out_ch), lambda i: (0, 0)),
                      pl.BlockSpec((1, p.cat_p), lambda i: (0, 0)),
                      pl.BlockSpec((1, p.hid), lambda i: (0, 0)),
                      pl.BlockSpec((1, p.out_ch), lambda i: (0, 0))],
            out_specs=pl.BlockSpec((p.n_pad, p.out_ch), lambda i: (0, 0)),
            compiler_params=pltpu.CompilerParams(
                dimension_semantics=("arbitrary",), vmem_limit_bytes=p.vmem_limit),
            cost_estimate=ce,
        )(x_p, a_hat, wcat, w2, bcat, b1, b2)
        return out_pad[:p.n]

    # ---- tiled 3-stage pipeline (row-tiled grid, resident weight / feature slabs) ----
    tm, nt, sb = p.tm, p.nt, p.single_buf
    cp = pltpu.CompilerParams(dimension_semantics=("parallel",),
                              vmem_limit_bytes=p.vmem_limit)

    ce1 = pl.CostEstimate(
        flops=2 * p.n_pad * p.in_p * p.cat_p, transcendentals=0,
        bytes_accessed=(2 * p.n_pad * p.in_p + 2 * p.in_p * p.cat_p
                        + 2 * p.n_pad * p.hid + 4 * p.n_pad * p.out_ch))
    ce2 = pl.CostEstimate(
        flops=2 * p.n_pad * p.n_pad * p.hid + 2 * p.n_pad * p.hid * p.out_ch,
        transcendentals=0,
        bytes_accessed=(2 * p.n_pad * p.n_pad + 2 * p.n_pad * p.hid        # slabs once
                        + 2 * p.hid * p.out_ch + 2 * p.n_pad * p.out_ch))
    ce3 = pl.CostEstimate(
        flops=2 * p.n_pad * p.n_pad * p.out_ch, transcendentals=0,
        bytes_accessed=(2 * p.n_pad * p.n_pad + 2 * p.n_pad * p.out_ch
                        + 8 * p.n_pad * p.out_ch))

    t1, res = pl.pallas_call(
        _make_xform_kernel(p.hid, p.out_ch),
        out_shape=(jax.ShapeDtypeStruct((p.n_pad, p.hid), bf16),
                   jax.ShapeDtypeStruct((p.n_pad, p.out_ch), f32)),
        grid=(nt,),
        in_specs=[pl.BlockSpec((tm, p.in_p), lambda i: (i, 0)),
                  _resident_spec((p.in_p, p.cat_p), sb),
                  _resident_spec((1, p.cat_p), sb)],
        out_specs=(pl.BlockSpec((tm, p.hid), lambda i: (i, 0)),
                   pl.BlockSpec((tm, p.out_ch), lambda i: (i, 0))),
        compiler_params=cp, cost_estimate=ce1,
    )(x_p, wcat, bcat)

    t2 = pl.pallas_call(
        _agg1_kernel,
        out_shape=jax.ShapeDtypeStruct((p.n_pad, p.out_ch), bf16),
        grid=(nt,),
        in_specs=[pl.BlockSpec((tm, p.n_pad), lambda i: (i, 0)),
                  _resident_spec((p.n_pad, p.hid), sb),
                  _resident_spec((1, p.hid), sb),
                  _resident_spec((p.hid, p.out_ch), sb)],
        out_specs=pl.BlockSpec((tm, p.out_ch), lambda i: (i, 0)),
        compiler_params=cp, cost_estimate=ce2,
    )(a_hat, t1, b1, w2)

    out_pad = pl.pallas_call(
        _agg2_kernel,
        out_shape=jax.ShapeDtypeStruct((p.n_pad, p.out_ch), f32),
        grid=(nt,),
        in_specs=[pl.BlockSpec((tm, p.n_pad), lambda i: (i, 0)),
                  _resident_spec((p.n_pad, p.out_ch), sb),
                  _resident_spec((1, p.out_ch), sb),
                  pl.BlockSpec((tm, p.out_ch), lambda i: (i, 0))],
        out_specs=pl.BlockSpec((tm, p.out_ch), lambda i: (i, 0)),
        compiler_params=cp, cost_estimate=ce3,
    )(a_hat, t2, b2, res)

    return out_pad[:p.n]


# ---------------------------------------------------------------------------
# Pure-JAX f32 reference (same edge / self-loop semantics)
# ---------------------------------------------------------------------------
def gcn_reference(x, edge_index, params):
    n = x.shape[0]
    adj = jnp.zeros((n, n), jnp.float32).at[edge_index[1], edge_index[0]].add(1.0)
    diag = jnp.diagonal(adj)
    adj = adj + jnp.diag(jnp.where(diag == 0.0, 1.0, 0.0))
    deg = adj.sum(axis=1)
    dinv = jnp.where(deg > 0, jax.lax.rsqrt(deg), 0.0)
    a_hat = dinv[:, None] * adj * dinv[None, :]
    res = x @ params["wfc"] + params["bfc"]
    h = jnp.maximum(a_hat @ (x @ params["w1"]) + params["b1"], 0.0)
    y = a_hat @ (h @ params["w2"]) + params["b2"]
    return jnp.maximum(y + res, 0.0)


def init_params(key, in_channel, hidden_channels, out_channel):
    ks = jax.random.split(key, 4)
    s1 = 1.0 / jnp.sqrt(in_channel)
    s2 = 1.0 / jnp.sqrt(hidden_channels)
    return {
        "w1": jax.random.uniform(ks[0], (in_channel, hidden_channels), jnp.float32, -s1, s1),
        "b1": jnp.zeros((hidden_channels,), jnp.float32),
        "w2": jax.random.uniform(ks[1], (hidden_channels, out_channel), jnp.float32, -s2, s2),
        "b2": jnp.zeros((out_channel,), jnp.float32),
        "wfc": jax.random.uniform(ks[2], (in_channel, out_channel), jnp.float32, -s1, s1),
        "bfc": jax.random.uniform(ks[3], (out_channel,), jnp.float32, -s1, s1),
    }


if __name__ == "__main__":
    key = jax.random.PRNGKey(0)
    k_x, k_e, k_p = jax.random.split(key, 3)

    N = 64        # graph nodes
    IN_CH = 256   # node feature dim (cnn_outdim in MetaFluAD)
    HID = 64      # hidden channels (128 // 2)
    OUT_CH = 64   # output channels (128 // 2)
    E = 256       # edges

    x = jax.random.normal(k_x, (N, IN_CH), jnp.float32)
    edge_index = jax.random.randint(k_e, (2, E), 0, N, jnp.int32)
    params = init_params(k_p, IN_CH, HID, OUT_CH)

    # Host-side static plans (generation-aware VMEM budgets).
    plan_fused = make_plan(N, IN_CH, HID, OUT_CH)                       # fused fast path
    plan_tiled = make_plan(N, IN_CH, HID, OUT_CH, row_tile=32,
                           force_tiled=True)                            # 3-stage tiled pipeline

    # Graph preprocessing hoisted out of the forward pass and cached per graph.
    a_hat_cache = {}

    def a_hat_for(plan):
        if plan.n_pad not in a_hat_cache:
            a_hat_cache[plan.n_pad] = jax.block_until_ready(
                prepare_graph(edge_index, num_nodes=N, n_pad=plan.n_pad))
        return a_hat_cache[plan.n_pad]

    out_fused = jax.block_until_ready(
        resgat_forward(x, a_hat_for(plan_fused), params, plan=plan_fused))
    out_tiled = jax.block_until_ready(
        resgat_forward(x, a_hat_for(plan_tiled), params, plan=plan_tiled))

    assert out_fused.shape == (N, OUT_CH) and out_tiled.shape == (N, OUT_CH)
    assert bool(jnp.all(jnp.isfinite(out_fused))) and bool(jnp.all(jnp.isfinite(out_tiled)))

    ref = gcn_reference(x, edge_index, params)
    err_f = float(jnp.max(jnp.abs(out_fused - ref)))
    err_t = float(jnp.max(jnp.abs(out_tiled - ref)))
    assert err_f < 0.2 and err_t < 0.2, (err_f, err_t)   # bf16 matmul tolerance

    print("KERNEL_OK")
</pallas_src>

<mosaic_0001>
module attributes {stable_mosaic.version = 11 : i64} {
  func.func @k(%arg0: i32, %arg1: memref<8x128xf32, #tpu.memory_space<vmem>>, %arg2: memref<8x128xf32, #tpu.memory_space<vmem>>) attributes {dimension_semantics = [#tpu.dimension_semantics<arbitrary>], iteration_bounds = array<i64: 2>, scalar_prefetch = 0 : i64, scratch_operands = 0 : i64, tpu.core_type = #tpu.core_type<tc>, window_params = [{pipeline_mode = #tpu.pipeline_mode<synchronous>, transform_indices = @transform_0, window_bounds = array<i64: 8, 128>}, {transform_indices = @transform_1, window_bounds = array<i64: 8, 128>}]} {
    %c0 = arith.constant 0 : index
    %c0_0 = arith.constant 0 : index
    %0 = vector.load %arg1[%c0, %c0_0] : memref<8x128xf32, #tpu.memory_space<vmem>>, vector<8x128xf32>
    %cst = arith.constant 2.000000e+00 : f32
    %1 = vector.broadcast %cst : f32 to vector<8x128xf32>
    %2 = arith.mulf %0, %1 : vector<8x128xf32>
    %c0_1 = arith.constant 0 : index
    %c0_2 = arith.constant 0 : index
    %3 = vector.load %arg2[%c0_1, %c0_2] : memref<8x128xf32, #tpu.memory_space<vmem>>, vector<8x128xf32>
    tpu.vector_store %arg2[%c0_1, %c0_2], %2 {strides = array<i32>} : memref<8x128xf32, #tpu.memory_space<vmem>>, vector<8x128xf32>,
    return
  }
  func.func @transform_0(%arg0: i32) -> (i32, i32) {
    %c0_i32 = arith.constant 0 : i32
    %c0_i32_0 = arith.constant 0 : i32
    %c0_i32_1 = arith.constant 0 : i32
    return %c0_i32, %c0_i32_0 : i32, i32
  }
  func.func @transform_1(%arg0: i32) -> (i32, i32) {
    %c0_i32 = arith.constant 0 : i32
    %c0_i32_0 = arith.constant 0 : i32
    return %arg0, %c0_i32 : i32, i32
  }
}

module attributes {stable_mosaic.version = 11 : i64} {
  func.func private @main(%arg0: i32) attributes {dimension_semantics = [#tpu.dimension_semantics<core_parallel>], iteration_bounds = array<i64: 2>, tpu.core_type = #tpu.core_type<sc_scalar_subcore>, window_params = []} {
    return
  }
}

module attributes {stable_mosaic.version = 11 : i64} {
  func.func private @main(%arg0: i32) attributes {dimension_semantics = [#tpu.dimension_semantics<core_parallel>], iteration_bounds = array<i64: 2>, tpu.core_type = #tpu.core_type<sc_scalar_subcore>, window_params = []} {
    return
  }
}

</mosaic_0001>

<llo_original>
// kernel: tpu_custom_call.1
$region0: #{tpu_custom_call.1}
  #allocation0 [shape = 'u32[]', space=smem, size = 0x4, offset = 0x4, fixed_abs, tag = 'smem constant byte address 0x4 - core index']
  #allocation1 [shape = 'u32[144,128]{1,0:T(1,128)}', space=vmem, size = 0x12000, scoped, tag = 'internal scratch']
  %s0 = inlined_call_operand.hbm [shape: f32[8,128], index: 0, kind: input, shape index: {}]
  %s1 = inlined_call_operand.hbm [shape: f32[16,128], index: 1, kind: output, shape index: {}]
  %s2 = sld [smem:[#allocation0]]
  $region41: #{tpu_custom_call.1} parent=0
    _
  %s4 = ssub.s32 1, %s2
  %s5 = scalar_select 0, %s4, %s2
  $region1: #{tpu_custom_call.1} parent=0
    #allocation2 [shape = 'u8[4096]{0}', space=vmem, size = 0x1000, scoped, tag = 'input window, operand 0, single buffered']
    #allocation3 [shape = 's32[2]{0}', space=sflag, size = 0x8, scoped, tag = 'scoped memory for tpu_custom_call.1']
    #allocation4 [shape = 's32[2]{0}', space=sflag, size = 0x8, scoped, tag = 'scoped memory for tpu_custom_call.1']
    #allocation5 [shape = 'u8[8192]{0}', space=vmem, size = 0x2000, scoped, tag = 'output window, operand 0']
    %6 = vsyncpa [#allocation3], 0
    %7 = vsyncpa [#allocation4], 0
    %s8 = scalar_lea.sflag [#allocation4], 1
    %9 = vsyncpa %s8, 0
    loop: start=0, step=1, limit=4
    $region2: #{tpu_custom_call.1} parent=1 // loop_pre_header
      _
    $region3: #{tpu_custom_call.1} parent=1 // loop_header
      %s11 = sphi 0, %s15
      %p12 = scmp.ge.s32.totalorder %s11, 4
      %s19 = sphi 0, %s19
      %s21 = sphi 0, %s19
      %s22 = sphi 0, %s21
      %s36 = sphi 0, %s22
      %s42 = sphi 0, %s44
      %s45 = sphi 0, %s42
      %s46 = sphi 0, %s45
      %s62 = sphi 0, %s46
    $region4: #{tpu_custom_call.1} parent=1 // loop_header_branch
      %14 = sbr.rel (%p12) target = $region8
    $region5: #{tpu_custom_call.1} parent=1 // loop_body
      %s16 = ssub.s32 %s11, 1
      %s17 = ssub.s32 %s11, 2
      %s18 = sadd.s32 %s11, 1
      %s20 = sadd.s32 %s19, 1
      %p23 = scmp.eq.s32.totalorder %s11, 1
      %p24 = scmp.ne.s32.totalorder %s19, %s21
      %p25 = scmp.eq.s32.totalorder %s11, 0
      %p26 = por %p24, %p25
      %p27 = scmp.ne.s32.totalorder %s19, %s21
      %p28 = scmp.eq.s32.totalorder %s16, 1
      %p29 = por %p27, %p28
      %p30 = scmp.ne.s32.totalorder %s21, %s22
      %p31 = scmp.eq.s32.totalorder %s16, 0
      %p32 = por %p30, %p31
      %p33 = scmp.ne.s32.totalorder %s21, %s22
      %p34 = scmp.eq.s32.totalorder %s17, 1
      %p35 = por %p33, %p34
      %p37 = scmp.ne.s32.totalorder %s22, %s36
      %p38 = scmp.eq.s32.totalorder %s17, 0
      %p39 = por %p37, %p38
      %s40 = ssub.s32 %s11, %s18
      %p41 = scmp.eq.s32.totalorder %s40, 0
      %s43 = sadd.s32 %s42, 1
      %s44 = scalar_select %p41, %s42, %s43
      %p47 = pneg %p41
      %p48 = scmp.eq.s32.totalorder %s11, 1
      %p49 = por %p47, %p48
      %p50 = scmp.ne.s32.totalorder %s42, %s45
      %p51 = scmp.eq.s32.totalorder %s11, 0
      %p52 = por %p50, %p51
      %p53 = scmp.ne.s32.totalorder %s42, %s45
      %p54 = scmp.eq.s32.totalorder %s16, 1
      %p55 = por %p53, %p54
      %p56 = scmp.ne.s32.totalorder %s45, %s46
      %p57 = scmp.eq.s32.totalorder %s16, 0
      %p58 = por %p56, %p57
      %p59 = scmp.ne.s32.totalorder %s45, %s46
      %p60 = scmp.eq.s32.totalorder %s17, 1
      %p61 = por %p59, %p60
      %p63 = scmp.ne.s32.totalorder %s46, %s62
      %p64 = scmp.eq.s32.totalorder %s17, 0
      %p65 = por %p63, %p64
      %p66 = scmp.le.s32.totalorder 1, %s11
      %p67 = scmp.lt.s32.totalorder %s11, 3
      %p68 = pnand %p66, %p67
      %p69 = pneg %p68
      // Predicated region
      $region9: #{tpu_custom_call.1} parent=5 // pred_check
        _
      $region10: #{tpu_custom_call.1} parent=5 // pred_check_branch
        %71 = sbr.rel (%p68) target = $region12
      $region11: #{tpu_custom_call.1} parent=5 // pred_region
        %s72 = ssub.s32 %s11, 1
        // Predicated region
        $region13: #{tpu_custom_call.1} parent=11 // pred_check
          %p73 = pneg %p32
        $region14: #{tpu_custom_call.1} parent=11 // pred_check_branch
          %75 = sbr.rel (%p73) target = $region16
        $region15: #{tpu_custom_call.1} parent=11 // pred_region
          %s77 = ssub.s32 128, 128
          %78 = vsyncadd [#allocation3], %s77
          %s80 = sshll.u32 [#allocation2], 4
          %s81 = int_to_ptr.vmem [resolvable:$true] %s80
          %83 = dma.hbm_to_vmem [thread:$0]  %s0, 128, %s81, [#allocation3]
        $region16: #{tpu_custom_call.1} parent=11 // pred_fallthru
          _
      $region12: #{tpu_custom_call.1} parent=5 // pred_fallthru
        _
      %p84 = scmp.lt.s32.totalorder %s11, 2
      // Predicated region
      $region17: #{tpu_custom_call.1} parent=5 // pred_check
        %p85 = pneg %p84
      $region18: #{tpu_custom_call.1} parent=5 // pred_check_branch
        %87 = sbr.rel (%p85) target = $region20
      $region19: #{tpu_custom_call.1} parent=5 // pred_region
        _
      $region20: #{tpu_custom_call.1} parent=5 // pred_fallthru
        _
      %p88 = scmp.le.s32.totalorder 1, %s11
      %p89 = scmp.lt.s32.totalorder %s11, 3
      %p90 = pnand %p88, %p89
      %p91 = pneg %p90
      // Predicated region
      $region21: #{tpu_custom_call.1} parent=5 // pred_check
        _
      $region22: #{tpu_custom_call.1} parent=5 // pred_check_branch
        %93 = sbr.rel (%p90) target = $region24
      $region23: #{tpu_custom_call.1} parent=5 // pred_region
        %s94 = ssub.s32 %s11, 1
        // Predicated region
        $region25: #{tpu_custom_call.1} parent=23 // pred_check
          %p95 = pneg %p32
        $region26: #{tpu_custom_call.1} parent=23 // pred_check_branch
          %97 = sbr.rel (%p95) target = $region28
        $region27: #{tpu_custom_call.1} parent=23 // pred_region
          %98 = dma.done [#allocation3], 128
        $region28: #{tpu_custom_call.1} parent=23 // pred_fallthru
          _
        %p99 = pneg %p32
        %p100 = pneg %p29
        %p101 = pneg %p58
        %p102 = pneg %p55
        %s103 = sand.u32 %s45, 1
        %s104 = scalar_lea.sflag [#allocation4], %s103
        %s105 = sand.u32 %s45, 1
        %s106 = smul.addr %s105, 8
        %s107 = scalar_lea.vmem [#allocation5], %s106
        %v108 = vld [vmem:[#allocation2] sm:$0xff]
        %v109 = vmul.f32 %v108, 2.0
        %110 = vst [vmem:[%s107] sm:$0xff] %v109
        %s111 = sand.u32 %s45, 1
        %s112 = scalar_lea.sflag [#allocation4], %s111
        %s113 = sand.u32 %s45, 1
        %s114 = smul.addr %s113, 8
        %s115 = scalar_lea.vmem [#allocation5], %s114
        // Predicated region
        $region29: #{tpu_custom_call.1} parent=23 // pred_check
          %p116 = pneg %p55
        $region30: #{tpu_custom_call.1} parent=23 // pred_check_branch
          %118 = sbr.rel (%p116) target = $region32
        $region31: #{tpu_custom_call.1} parent=23 // pred_region
          %s120 = ssub.s32 128, 128
          %121 = vsyncadd %s112, %s120
          %s122 = smul.addr %s16, 128
          %s123 = scalar_lea.hbm %s1, %s122
          %s125 = sshll.u32 %s115, 4
          %s126 = int_to_ptr.vmem [resolvable:$true] %s125
          %128 = dma.vmem_to_hbm [thread:$0]  %s126, 128, %s123, %s112
        $region32: #{tpu_custom_call.1} parent=23 // pred_fallthru
          _
      $region24: #{tpu_custom_call.1} parent=5 // pred_fallthru
        _
      %p129 = scmp.le.s32.totalorder 2, %s11
      // Predicated region
      $region33: #{tpu_custom_call.1} parent=5 // pred_check
        %p130 = pneg %p129
      $region34: #{tpu_custom_call.1} parent=5 // pred_check_branch
        %132 = sbr.rel (%p130) target = $region36
      $region35: #{tpu_custom_call.1} parent=5 // pred_region
        %s133 = ssub.s32 %s11, 2
        // Predicated region
        $region37: #{tpu_custom_call.1} parent=35 // pred_check
          %p134 = pneg %p61
        $region38: #{tpu_custom_call.1} parent=35 // pred_check_branch
          %136 = sbr.rel (%p134) target = $region40
        $region39: #{tpu_custom_call.1} parent=35 // pred_region
          %s137 = sand.u32 %s46, 1
          %s138 = scalar_lea.sflag [#allocation4], %s137
          %s139 = sand.u32 %s46, 1
          %s140 = smul.addr %s139, 8
          %s141 = scalar_lea.vmem [#allocation5], %s140
          %142 = dma.done %s138, 128
        $region40: #{tpu_custom_call.1} parent=35 // pred_fallthru
          _
      $region36: #{tpu_custom_call.1} parent=5 // pred_fallthru
        _
    $region6: #{tpu_custom_call.1} parent=1 // loop_footer
      %s15 = sadd.s32 1, %s11
    $region7: #{tpu_custom_call.1} parent=1 // loop_footer_branch
      %10 = sbr.rel target = $region3
    $region8: #{tpu_custom_call.1} parent=1 // loop_exit
      _
    %143 = vsyncpa [#allocation3], 1
    %s144 = scalar_lea.sflag [#allocation3], 1
    %145 = vsyncpa %s144, 1
    %146 = vsyncpa [#allocation4], 1
    %s147 = scalar_lea.sflag [#allocation4], 1
    %148 = vsyncpa %s147, 1

</llo_original>
